<compile_context>
chip_gen: v6e
topology: v6e:2x2x1
jax: 0.10.0
libtpu: 0.0.40
codegen_flags: <defaults>
</compile_context>

<pallas_src>
import functools
import numpy as np

import jax
import jax.numpy as jnp
from jax.experimental import pallas as pl
from jax.experimental.pallas import tpu as pltpu

_BN_EPS = 1e-5
_ACT_DTYPE = jnp.bfloat16


def _round_up(x, m):
    return (x + m - 1) // m * m


def _maybe_pad2(a, p0, p1, value=0.0):
    if p0 == 0 and p1 == 0:
        return a
    return jnp.pad(a, ((0, p0), (0, p1)), constant_values=value)


# ----------------------------------------------------------------------------
# Pallas kernels
# ----------------------------------------------------------------------------
def _mm_bn_act_kernel(a_ref, b_ref, scale_ref, shift_ref, o_ref, acc_ref, *, relu):
    """Tiled bf16 matmul (f32 accumulation over the K grid axis) with fused
    per-channel scale/shift (folded BN or bias) and optional ReLU."""
    k = pl.program_id(2)

    @pl.when(k == 0)
    def _():
        acc_ref[...] = jnp.zeros_like(acc_ref)

    acc_ref[...] += jnp.dot(a_ref[...], b_ref[...],
                            preferred_element_type=jnp.float32)

    @pl.when(k == pl.num_programs(2) - 1)
    def _():
        y = acc_ref[...] * scale_ref[...] + shift_ref[...]
        if relu:
            y = jnp.maximum(y, 0.0)
        o_ref[...] = y.astype(o_ref.dtype)


def _mm_bn_res_act_kernel(a_ref, b_ref, scale_ref, shift_ref, id_ref,
                          o_ref, acc_ref, *, relu):
    """Same as above but with a fused residual add before the ReLU."""
    k = pl.program_id(2)

    @pl.when(k == 0)
    def _():
        acc_ref[...] = jnp.zeros_like(acc_ref)

    acc_ref[...] += jnp.dot(a_ref[...], b_ref[...],
                            preferred_element_type=jnp.float32)

    @pl.when(k == pl.num_programs(2) - 1)
    def _():
        y = acc_ref[...] * scale_ref[...] + shift_ref[...]
        y = y + id_ref[...].astype(jnp.float32)
        if relu:
            y = jnp.maximum(y, 0.0)
        o_ref[...] = y.astype(o_ref.dtype)


def _mm_bn_act_direct_kernel(a_ref, b_ref, scale_ref, shift_ref, o_ref, *, relu):
    """Single-K-step matmul: no VMEM accumulator scratch, fused epilogue."""
    y = jnp.dot(a_ref[...], b_ref[...], preferred_element_type=jnp.float32)
    y = y * scale_ref[...] + shift_ref[...]
    if relu:
        y = jnp.maximum(y, 0.0)
    o_ref[...] = y.astype(o_ref.dtype)


def _mm_bn_res_act_direct_kernel(a_ref, b_ref, scale_ref, shift_ref, id_ref,
                                 o_ref, *, relu):
    """Single-K-step matmul with fused residual add (+ ReLU)."""
    y = jnp.dot(a_ref[...], b_ref[...], preferred_element_type=jnp.float32)
    y = y * scale_ref[...] + shift_ref[...]
    y = y + id_ref[...].astype(jnp.float32)
    if relu:
        y = jnp.maximum(y, 0.0)
    o_ref[...] = y.astype(o_ref.dtype)


def _max9_kernel(x_ref, o_ref):
    """Max over 9 shifted views of a 3x3 pooling window (lane-dense blocks)."""
    m = x_ref[0]
    for i in range(1, 9):
        m = jnp.maximum(m, x_ref[i])
    o_ref[...] = m


def _bilerp_kernel(x00_ref, x01_ref, x10_ref, x11_ref,
                   w00_ref, w01_ref, w10_ref, w11_ref, o_ref):
    """4-tap bilinear interpolation: out = sum_i w_i * corner_i (pure VPU)."""
    acc = (x00_ref[...].astype(jnp.float32) * w00_ref[...]
           + x01_ref[...].astype(jnp.float32) * w01_ref[...]
           + x10_ref[...].astype(jnp.float32) * w10_ref[...]
           + x11_ref[...].astype(jnp.float32) * w11_ref[...])
    o_ref[...] = acc.astype(o_ref.dtype)


# ----------------------------------------------------------------------------
# Pallas wrappers
# ----------------------------------------------------------------------------
def _mm_tiles(M, K, N):
    """Pick (tile, padded) sizes: single tile when small, else 256/2048/512."""
    mr = _round_up(max(M, 1), 16)                    # bf16 sublane packing
    if mr <= 256:
        tm, Mp = mr, mr
    else:
        tm, Mp = 256, _round_up(M, 256)
    kr = _round_up(K, 128)
    if kr <= 2048:
        tk, Kp = kr, kr
    else:
        tk, Kp = 2048, _round_up(K, 2048)
    nr = _round_up(N, 128)
    if nr <= 512:
        tn, Np = nr, nr
    else:
        tn, Np = 512, _round_up(N, 512)
    return tm, Mp, tk, Kp, tn, Np


def _pallas_matmul(a, b, scale, shift, identity, *, relu, out_dtype):
    """out = maybe_relu((a @ b) * scale + shift [+ identity]).

    a:(M,K)  b:(K,N)  scale/shift:(N,)  identity: (M,N) or None.
    bf16 MXU operands, f32 accumulation, fused epilogue."""
    M, K = a.shape
    _, N = b.shape
    tm, Mp, tk, Kp, tn, Np = _mm_tiles(M, K, N)
    k_steps = Kp // tk

    a_p = _maybe_pad2(a.astype(jnp.bfloat16), Mp - M, Kp - K)
    b_p = _maybe_pad2(b.astype(jnp.bfloat16), Kp - K, Np - N)
    sc = jnp.pad(scale.astype(jnp.float32), (0, Np - N)).reshape(1, Np)
    sh = jnp.pad(shift.astype(jnp.float32), (0, Np - N)).reshape(1, Np)

    grid = (Mp // tm, Np // tn, k_steps)
    a_spec = pl.BlockSpec((tm, tk), lambda m, n, k: (m, k))
    b_spec = pl.BlockSpec((tk, tn), lambda m, n, k: (k, n))
    v_spec = pl.BlockSpec((1, tn), lambda m, n, k: (0, n))
    o_spec = pl.BlockSpec((tm, tn), lambda m, n, k: (m, n))

    direct = (k_steps == 1)
    if identity is None:
        kernel = functools.partial(
            _mm_bn_act_direct_kernel if direct else _mm_bn_act_kernel, relu=relu)
        in_specs = [a_spec, b_spec, v_spec, v_spec]
        operands = (a_p, b_p, sc, sh)
    else:
        id_p = _maybe_pad2(identity.astype(jnp.bfloat16), Mp - M, Np - N)
        kernel = functools.partial(
            _mm_bn_res_act_direct_kernel if direct else _mm_bn_res_act_kernel,
            relu=relu)
        in_specs = [a_spec, b_spec, v_spec, v_spec, o_spec]
        operands = (a_p, b_p, sc, sh, id_p)

    scratch_shapes = [] if direct else [pltpu.VMEM((tm, tn), jnp.float32)]

    out = pl.pallas_call(
        kernel,
        out_shape=jax.ShapeDtypeStruct((Mp, Np), out_dtype),
        grid_spec=pltpu.PrefetchScalarGridSpec(
            num_scalar_prefetch=0,
            grid=grid,
            in_specs=in_specs,
            out_specs=o_spec,
            scratch_shapes=scratch_shapes,
        ),
        compiler_params=pltpu.CompilerParams(
            dimension_semantics=("parallel", "parallel", "arbitrary")),
    )(*operands)
    return out[:M, :N]


@functools.partial(jax.jit, static_argnames=("stride", "padding", "relu", "out_dtype"))
def conv2d_bn_act(x, w, scale, shift, identity=None, *, stride=1, padding=0,
                  relu=False, out_dtype=_ACT_DTYPE):
    """NHWC conv (bias-free) + folded BN scale/shift (+ residual add) (+ ReLU).

    x: (N,H,W,Cin)  w: (KH,KW,Cin,Cout)  identity: (N,Ho,Wo,Cout) or None."""
    # TODO(synk): implicit-GEMM (in-kernel im2col) would remove the patch
    # materialization for large spatial inputs; at these spatial sizes the
    # XLA-side channels-last im2col is cheap.
    N, H, W, Cin = x.shape
    KH, KW, _, Cout = w.shape
    Ho = (H + 2 * padding - KH) // stride + 1
    Wo = (W + 2 * padding - KW) // stride + 1
    xp = (jnp.pad(x, ((0, 0), (padding, padding), (padding, padding), (0, 0)))
          if padding else x)
    if KH == 1 and KW == 1 and stride == 1:
        patches = xp
    else:
        cols = []
        for kh in range(KH):
            for kw in range(KW):
                cols.append(xp[:, kh:kh + stride * (Ho - 1) + 1:stride,
                               kw:kw + stride * (Wo - 1) + 1:stride, :])
        patches = jnp.concatenate(cols, axis=-1)       # (N,Ho,Wo,KH*KW*Cin)
    a = patches.reshape(N * Ho * Wo, KH * KW * Cin)
    bmat = w.reshape(KH * KW * Cin, Cout)
    idm = identity.reshape(N * Ho * Wo, Cout) if identity is not None else None
    out = _pallas_matmul(a, bmat, scale, shift, idm, relu=relu, out_dtype=out_dtype)
    return out.reshape(N, Ho, Wo, Cout)


@jax.jit
def maxpool3x3_s2_p1(x):
    """nn.MaxPool2d(kernel_size=3, stride=2, padding=1) on NHWC."""
    N, H, W, C = x.shape
    Ho = (H + 2 - 3) // 2 + 1
    Wo = (W + 2 - 3) // 2 + 1
    xp = jnp.pad(x, ((0, 0), (1, 1), (1, 1), (0, 0)), constant_values=-np.inf)
    views = [xp[:, kh:kh + 2 * (Ho - 1) + 1:2, kw:kw + 2 * (Wo - 1) + 1:2, :]
             for kh in range(3) for kw in range(3)]
    stacked = jnp.stack(views, axis=0).reshape(9, -1)
    T = stacked.shape[1]
    Tp = _round_up(T, 8 * 128)
    stacked = _maybe_pad2(stacked, 0, Tp - T, value=-np.inf)
    stacked = stacked.reshape(9, Tp // 128, 128)
    out = pl.pallas_call(
        _max9_kernel,
        out_shape=jax.ShapeDtypeStruct((Tp // 128, 128), x.dtype),
    )(stacked)
    return out.reshape(-1)[:T].reshape(N, Ho, Wo, C)


def _interp_1d(in_size, out_size, align_corners):
    """PyTorch-compatible 1D bilinear indices / fractions (numpy, trace-time)."""
    i = np.arange(out_size, dtype=np.float64)
    if align_corners:
        s = i * (in_size - 1) / (out_size - 1) if out_size > 1 else np.zeros_like(i)
    else:
        s = (i + 0.5) * in_size / out_size - 0.5
        s = np.clip(s, 0.0, in_size - 1)
    i0 = np.clip(np.floor(s), 0, in_size - 1).astype(np.int32)
    i1 = np.minimum(i0 + 1, in_size - 1).astype(np.int32)
    frac = (s - i0).astype(np.float32)
    return i0, i1, frac


@functools.partial(jax.jit, static_argnames=("out_h", "out_w", "align_corners"))
def bilinear_resize(x, *, out_h, out_w, align_corners):
    """F.interpolate(mode='bilinear') as XLA corner-gather + Pallas 4-tap lerp."""
    N, H, W, C = x.shape
    h0, h1, fh = _interp_1d(H, out_h, align_corners)
    w0, w1, fw = _interp_1d(W, out_w, align_corners)

    xh0 = jnp.take(x, jnp.asarray(h0), axis=1)
    xh1 = jnp.take(x, jnp.asarray(h1), axis=1)
    R = N * out_h * out_w
    x00 = jnp.take(xh0, jnp.asarray(w0), axis=2).reshape(R, C)
    x01 = jnp.take(xh0, jnp.asarray(w1), axis=2).reshape(R, C)
    x10 = jnp.take(xh1, jnp.asarray(w0), axis=2).reshape(R, C)
    x11 = jnp.take(xh1, jnp.asarray(w1), axis=2).reshape(R, C)

    def wmap(a, b):
        w = np.outer(a, b).reshape(-1)                  # (out_h*out_w,)
        w = np.tile(w, N).reshape(R, 1)
        return jnp.asarray(w, jnp.float32)

    w00 = wmap(1.0 - fh, 1.0 - fw)
    w01 = wmap(1.0 - fh, fw)
    w10 = wmap(fh, 1.0 - fw)
    w11 = wmap(fh, fw)

    out = pl.pallas_call(
        _bilerp_kernel,
        out_shape=jax.ShapeDtypeStruct((R, C), x.dtype),
    )(x00, x01, x10, x11, w00, w01, w10, w11)
    return out.reshape(N, out_h, out_w, C)


# ----------------------------------------------------------------------------
# Parameters (deterministic, synthetic)
# ----------------------------------------------------------------------------
def bn_scale_shift(c):
    # BatchNorm2d(c), PyTorch default init/running stats, eval mode:
    #   y = x / sqrt(1 + eps)
    s = jnp.full((c,), np.float32(1.0 / np.sqrt(1.0 + _BN_EPS)), jnp.float32)
    return s, jnp.zeros((c,), jnp.float32)


class ParamGen:
    """Deterministic He-style (scaled) synthetic weights in (KH,KW,Cin,Cout)."""

    def __init__(self, seed=0):
        self.rng = np.random.default_rng(seed)

    def _w(self, kh, kw, cin, cout, fan_in):
        std = np.float32(0.7 * np.sqrt(2.0 / fan_in))
        return self.rng.standard_normal((kh, kw, cin, cout), dtype=np.float32) * std

    def conv_bn(self, cin, cout, k):
        w = jnp.asarray(self._w(k, k, cin, cout, cin * k * k), dtype=jnp.bfloat16)
        s, b = bn_scale_shift(cout)
        return {"w": w, "scale": s, "shift": b}

    def grouped_conv_bn(self, cin, cout, k, groups):
        # TODO(synk): groups=32 realised as a block-diagonal dense weight
        # (mathematically identical and lane-dense; a true per-group matmul
        # with cin/g = 4 lanes would badly under-utilise the MXU here).
        cin_g, cout_g = cin // groups, cout // groups
        w = np.zeros((k, k, cin, cout), np.float32)
        for g in range(groups):
            w[:, :, g * cin_g:(g + 1) * cin_g, g * cout_g:(g + 1) * cout_g] = \
                self._w(k, k, cin_g, cout_g, cin_g * k * k)
        s, b = bn_scale_shift(cout)
        return {"w": jnp.asarray(w, jnp.bfloat16), "scale": s, "shift": b}

    def out_conv(self, cin, cout):
        w = jnp.asarray(self._w(1, 1, cin, cout, cin), dtype=jnp.bfloat16)
        bias = jnp.asarray(
            self.rng.standard_normal((cout,), dtype=np.float32) * np.float32(0.01))
        return {"w": w, "scale": jnp.ones((cout,), jnp.float32), "shift": bias}


def conv_call(x, cp, *, stride=1, padding=0, relu=False, identity=None,
              out_dtype=_ACT_DTYPE):
    return conv2d_bn_act(x, cp["w"], cp["scale"], cp["shift"], identity,
                         stride=stride, padding=padding, relu=relu,
                         out_dtype=out_dtype)


# ----------------------------------------------------------------------------
# Backbones (torchvision-style ResNet feature extractors)
# ----------------------------------------------------------------------------
def build_resnet(pg, block, layers, groups=1, width_per_group=64):
    params = {"block": block, "conv1": pg.conv_bn(3, 64, 7), "layers": []}
    inplanes = 64
    for li, nblocks in enumerate(layers):
        planes = 64 * (2 ** li)
        stride = 1 if li == 0 else 2
        blocks = []
        for bi in range(nblocks):
            s = stride if bi == 0 else 1
            blk = {"stride": s}
            if block == "basic":
                out_ch = planes
                blk["conv1"] = pg.conv_bn(inplanes, planes, 3)
                blk["conv2"] = pg.conv_bn(planes, planes, 3)
            else:  # bottleneck
                out_ch = planes * 4
                width = int(planes * (width_per_group / 64.0)) * groups
                blk["conv1"] = pg.conv_bn(inplanes, width, 1)
                blk["conv2"] = pg.grouped_conv_bn(width, width, 3, groups)
                blk["conv3"] = pg.conv_bn(width, out_ch, 1)
            if s != 1 or inplanes != out_ch:
                blk["down"] = pg.conv_bn(inplanes, out_ch, 1)
            blocks.append(blk)
            inplanes = out_ch
        params["layers"].append(blocks)
    return params


def resnet_stages(params, x):
    """Return [stage0 (post stem ReLU), stage1..stage4] (IntermediateLayerGetter)."""
    x = conv_call(x, params["conv1"], stride=2, padding=3, relu=True)
    stage0 = x
    x = maxpool3x3_s2_p1(x)
    outs = [stage0]
    basic = params["block"] == "basic"
    for blocks in params["layers"]:
        for blk in blocks:
            identity = (conv_call(x, blk["down"], stride=blk["stride"],
                                  padding=0, relu=False)
                        if "down" in blk else x)
            if basic:
                out = conv_call(x, blk["conv1"], stride=blk["stride"],
                                padding=1, relu=True)
                # conv2 + BN + residual add + ReLU fused in one kernel
                x = conv_call(out, blk["conv2"], stride=1, padding=1,
                              relu=True, identity=identity)
            else:
                out = conv_call(x, blk["conv1"], stride=1, padding=0, relu=True)
                out = conv_call(out, blk["conv2"], stride=blk["stride"],
                                padding=1, relu=True)
                # conv3 + BN + residual add + ReLU fused in one kernel
                x = conv_call(out, blk["conv3"], stride=1, padding=0,
                              relu=True, identity=identity)
        outs.append(x)
    return outs


# ----------------------------------------------------------------------------
# Decoder blocks
# ----------------------------------------------------------------------------
def build_double_conv(pg, cin, cout, cmid=None):
    if cmid is None:
        cmid = cout
    return {"c1": pg.conv_bn(cin, cmid, 3), "c2": pg.conv_bn(cmid, cout, 3)}


def double_conv(params, x):
    x = conv_call(x, params["c1"], stride=1, padding=1, relu=True)
    x = conv_call(x, params["c2"], stride=1, padding=1, relu=True)
    return x


def up_forward(params, x1, x2):
    # Up: bilinear x2 upsample (align_corners=True), pad to x2, concat, DoubleConv
    _, h, w, _ = x1.shape
    x1 = bilinear_resize(x1, out_h=2 * h, out_w=2 * w, align_corners=True)
    dy = x2.shape[1] - x1.shape[1]
    dx = x2.shape[2] - x1.shape[2]
    x1 = jnp.pad(x1, ((0, 0), (dy // 2, dy - dy // 2),
                      (dx // 2, dx - dx // 2), (0, 0)))
    x = jnp.concatenate([x2, x1], axis=-1)
    return double_conv(params, x)


# ----------------------------------------------------------------------------
# ThreeResnetUnet
# ----------------------------------------------------------------------------
def build_three_resnet_unet(num_classes, seed=0):
    pg = ParamGen(seed)
    soc = [64, 256, 512, 1024, 2048]     # resnext50_32x4d
    soc1 = [64, 64, 128, 256, 512]       # resnet34
    soc2 = [64, 256, 512, 1024, 2048]    # resnet152
    p = {}
    p["backbone"] = build_resnet(pg, "bottleneck", [3, 4, 6, 3],
                                 groups=32, width_per_group=4)    # resnext50_32x4d
    p["backbone1"] = build_resnet(pg, "basic", [3, 4, 6, 3])       # resnet34
    p["backbone2"] = build_resnet(pg, "bottleneck", [3, 8, 36, 3])  # resnet152
    p["cc1"] = build_double_conv(pg, soc[4] + soc1[4] + soc2[4], soc[4])
    p["cc2"] = build_double_conv(pg, soc[3] + soc1[3] + soc2[3], soc[3])
    p["cc3"] = build_double_conv(pg, soc[2] + soc1[2] + soc2[2], soc[2])
    p["cc4"] = build_double_conv(pg, soc[1] + soc1[1] + soc2[1], soc[1])
    p["cc5"] = build_double_conv(pg, soc[0] + soc1[0] + soc2[0], soc[0])
    c = soc[4] + soc[3]; p["up1"] = build_double_conv(pg, c, soc[3], c // 2)
    c = soc[3] + soc[2]; p["up2"] = build_double_conv(pg, c, soc[2], c // 2)
    c = soc[2] + soc[1]; p["up3"] = build_double_conv(pg, c, soc[1], c // 2)
    c = soc[1] + soc[0]; p["up4"] = build_double_conv(pg, c, soc[0], c // 2)
    p["out"] = pg.out_conv(soc[0], num_classes)   # OutConv: Conv2d(64, nc, 1) + bias
    return p


def three_resnet_unet_forward(p, x_nchw):
    in_h, in_w = int(x_nchw.shape[-2]), int(x_nchw.shape[-1])
    x = jnp.transpose(x_nchw, (0, 2, 3, 1)).astype(_ACT_DTYPE)   # NHWC, bf16

    b0 = resnet_stages(p["backbone"], x)
    b1 = resnet_stages(p["backbone1"], x)
    b2 = resnet_stages(p["backbone2"], x)

    def cat(i):
        return jnp.concatenate([b0[i], b1[i], b2[i]], axis=-1)

    x4 = double_conv(p["cc1"], cat(4))
    x3 = double_conv(p["cc2"], cat(3))
    x2 = double_conv(p["cc3"], cat(2))
    x1 = double_conv(p["cc4"], cat(1))
    x0 = double_conv(p["cc5"], cat(0))

    y = up_forward(p["up1"], x4, x3)
    y = up_forward(p["up2"], y, x2)
    y = up_forward(p["up3"], y, x1)
    y = up_forward(p["up4"], y, x0)

    # OutConv: 1x1 conv with bias, no BN / ReLU -> f32 output
    y = conv_call(y, p["out"], stride=1, padding=0, relu=False,
                  out_dtype=jnp.float32)

    # final F.interpolate(size=input_shape, mode='bilinear', align_corners=False)
    y = bilinear_resize(y, out_h=in_h, out_w=in_w, align_corners=False)
    y = jnp.transpose(y, (0, 3, 1, 2)).astype(jnp.float32)       # back to NCHW
    return {"out": y}


# ----------------------------------------------------------------------------
if __name__ == "__main__":
    num_classes = 3
    params = build_three_resnet_unet(num_classes, seed=0)

    key = jax.random.PRNGKey(0)
    x = jax.random.normal(key, (1, 3, 32, 32), dtype=jnp.float32)   # NCHW

    out = three_resnet_unet_forward(params, x)
    y = jax.block_until_ready(out["out"])

    assert y.shape == (1, num_classes, 32, 32), y.shape
    assert y.dtype == jnp.float32
    assert bool(jnp.all(jnp.isfinite(y)))
    print("KERNEL_OK")
</pallas_src>

<mosaic_0001>
module attributes {stable_mosaic.version = 11 : i64} {
  func.func @_mm_bn_act_direct_kernel(%arg0: i32, %arg1: i32, %arg2: i32, %arg3: memref<256x256xbf16, #tpu.memory_space<vmem>>, %arg4: memref<256x128xbf16, #tpu.memory_space<vmem>>, %arg5: memref<1x128xf32, #tpu.memory_space<vmem>>, %arg6: memref<1x128xf32, #tpu.memory_space<vmem>>, %arg7: memref<256x128xbf16, #tpu.memory_space<vmem>>) attributes {dimension_semantics = [#tpu.dimension_semantics<parallel>, #tpu.dimension_semantics<parallel>, #tpu.dimension_semantics<arbitrary>], iteration_bounds = array<i64: 1, 1, 1>, scalar_prefetch = 0 : i64, scratch_operands = 0 : i64, tpu.core_type = #tpu.core_type<tc>, window_params = [{transform_indices = @transform_0, window_bounds = array<i64: 256, 256>}, {transform_indices = @transform_1, window_bounds = array<i64: 256, 128>}, {transform_indices = @transform_2, window_bounds = array<i64: 1, 128>}, {transform_indices = @transform_3, window_bounds = array<i64: 1, 128>}, {transform_indices = @transform_4, window_bounds = array<i64: 256, 128>}]} {
    %c0 = arith.constant 0 : index
    %c0_0 = arith.constant 0 : index
    %0 = vector.load %arg3[%c0, %c0_0] : memref<256x256xbf16, #tpu.memory_space<vmem>>, vector<256x256xbf16>
    %c0_1 = arith.constant 0 : index
    %c0_2 = arith.constant 0 : index
    %1 = vector.load %arg4[%c0_1, %c0_2] : memref<256x128xbf16, #tpu.memory_space<vmem>>, vector<256x128xbf16>
    %cst = arith.constant dense<0.000000e+00> : vector<256x128xf32>
    %2 = tpu.matmul %0, %1, %cst {dimension_numbers = #tpu.dot_dimension_numbers<[1], [0], [0], [1], [0, 0, 1, 1], [], []>} : vector<256x256xbf16>, vector<256x128xbf16>, vector<256x128xf32> -> vector<256x128xf32>
    %c0_3 = arith.constant 0 : index
    %c0_4 = arith.constant 0 : index
    %3 = vector.load %arg5[%c0_3, %c0_4] : memref<1x128xf32, #tpu.memory_space<vmem>>, vector<1x128xf32>
    %4 = vector.broadcast %3 : vector<1x128xf32> to vector<256x128xf32>
    %5 = arith.mulf %2, %4 : vector<256x128xf32>
    %c0_5 = arith.constant 0 : index
    %c0_6 = arith.constant 0 : index
    %6 = vector.load %arg6[%c0_5, %c0_6] : memref<1x128xf32, #tpu.memory_space<vmem>>, vector<1x128xf32>
    %7 = vector.broadcast %6 : vector<1x128xf32> to vector<256x128xf32>
    %8 = arith.addf %5, %7 : vector<256x128xf32>
    %cst_7 = arith.constant 0.000000e+00 : f32
    %9 = vector.broadcast %cst_7 : f32 to vector<256x128xf32>
    %10 = arith.maximumf %8, %9 : vector<256x128xf32>
    %11 = arith.truncf %10 : vector<256x128xf32> to vector<256x128xbf16>
    %c0_8 = arith.constant 0 : index
    %c0_9 = arith.constant 0 : index
    %12 = vector.load %arg7[%c0_8, %c0_9] : memref<256x128xbf16, #tpu.memory_space<vmem>>, vector<256x128xbf16>
    tpu.vector_store %arg7[%c0_8, %c0_9], %11 {strides = array<i32>} : memref<256x128xbf16, #tpu.memory_space<vmem>>, vector<256x128xbf16>,
    return
  }
  func.func @transform_0(%arg0: i32, %arg1: i32, %arg2: i32) -> (i32, i32) {
    %c0_i32 = arith.constant 0 : i32
    return %arg0, %arg2 : i32, i32
  }
  func.func @transform_1(%arg0: i32, %arg1: i32, %arg2: i32) -> (i32, i32) {
    %c0_i32 = arith.constant 0 : i32
    return %arg2, %arg1 : i32, i32
  }
  func.func @transform_2(%arg0: i32, %arg1: i32, %arg2: i32) -> (i32, i32) {
    %c0_i32 = arith.constant 0 : i32
    %c0_i32_0 = arith.constant 0 : i32
    return %c0_i32, %arg1 : i32, i32
  }
  func.func @transform_3(%arg0: i32, %arg1: i32, %arg2: i32) -> (i32, i32) {
    %c0_i32 = arith.constant 0 : i32
    %c0_i32_0 = arith.constant 0 : i32
    return %c0_i32, %arg1 : i32, i32
  }
  func.func @transform_4(%arg0: i32, %arg1: i32, %arg2: i32) -> (i32, i32) {
    %c0_i32 = arith.constant 0 : i32
    return %arg0, %arg1 : i32, i32
  }
}

</mosaic_0001>

<llo_original>
// kernel: conv2d_bn_act.1
$region0: #{conv2d_bn_act.1}
  #allocation0 [shape = 'u32[]', space=smem, size = 0x4, offset = 0x4, fixed_abs, tag = 'smem constant byte address 0x4 - core index']
  #allocation1 [shape = 'u32[144,128]{1,0:T(1,128)}', space=vmem, size = 0x12000, scoped, tag = 'internal scratch']
  %s0 = inlined_call_operand.vmem [shape: bf16[256,256], index: 0, kind: input, shape index: {}]
  %s1 = inlined_call_operand.vmem [shape: bf16[256,128], index: 1, kind: input, shape index: {}]
  %s2 = inlined_call_operand.vmem [shape: f32[1,128], index: 2, kind: input, shape index: {}]
  %s3 = inlined_call_operand.vmem [shape: f32[1,128], index: 3, kind: input, shape index: {}]
  %s4 = inlined_call_operand.hbm [shape: bf16[256,128], index: 4, kind: output, shape index: {}]
  %s5 = sld [smem:[#allocation0]]
  $region26: #{conv2d_bn_act.1} parent=0
    _
  %s7 = ssub.s32 1, %s5
  %s8 = scalar_select 0, %s7, %s5
  $region1: #{conv2d_bn_act.1} parent=0
    #allocation2 [shape = 'u8[65536]{0}', space=vmem, size = 0x10000, scoped, tag = 'output window, operand 0, single buffered']
    #allocation3 [shape = 's32[1]{0}', space=sflag, size = 0x4, scoped, tag = 'scoped memory for conv2d_bn_act.1']
    %9 = vsyncpa [#allocation3], 0
    // Predicated region
    $region2: #{conv2d_bn_act.1} parent=1 // pred_check
      _
    $region3: #{conv2d_bn_act.1} parent=1 // pred_check_branch
      %11 = sbr.rel (0) target = $region5
    $region4: #{conv2d_bn_act.1} parent=1 // pred_region
      _
    $region5: #{conv2d_bn_act.1} parent=1 // pred_fallthru
      _
    // Predicated region
    $region6: #{conv2d_bn_act.1} parent=1 // pred_check
      _
    $region7: #{conv2d_bn_act.1} parent=1 // pred_check_branch
      %13 = sbr.rel (0) target = $region9
    $region8: #{conv2d_bn_act.1} parent=1 // pred_region
      _
    $region9: #{conv2d_bn_act.1} parent=1 // pred_fallthru
      _
    // Predicated region
    $region10: #{conv2d_bn_act.1} parent=1 // pred_check
      _
    $region11: #{conv2d_bn_act.1} parent=1 // pred_check_branch
      %15 = sbr.rel (0) target = $region13
    $region12: #{conv2d_bn_act.1} parent=1 // pred_region
      _
    $region13: #{conv2d_bn_act.1} parent=1 // pred_fallthru
      _
    // Predicated region
    $region14: #{conv2d_bn_act.1} parent=1 // pred_check
      _
    $region15: #{conv2d_bn_act.1} parent=1 // pred_check_branch
      %17 = sbr.rel (0) target = $region17
    $region16: #{conv2d_bn_act.1} parent=1 // pred_region
      _
    $region17: #{conv2d_bn_act.1} parent=1 // pred_fallthru
      _
    %v19 = vld [vmem:[%s0] sm:$0xff]
    %v20 = vld [vmem:[%s0 + $0x8] sm:$0xff]
    %v21 = vld [vmem:[%s0 + $0x10] sm:$0xff]
    %v22 = vld [vmem:[%s0 + $0x18] sm:$0xff]
    %v23 = vld [vmem:[%s0 + $0x20] sm:$0xff]
    %v24 = vld [vmem:[%s0 + $0x28] sm:$0xff]
    %v25 = vld [vmem:[%s0 + $0x30] sm:$0xff]
    %v26 = vld [vmem:[%s0 + $0x38] sm:$0xff]
    %v27 = vld [vmem:[%s0 + $0x40] sm:$0xff]
    %v28 = vld [vmem:[%s0 + $0x48] sm:$0xff]
    %v29 = vld [vmem:[%s0 + $0x50] sm:$0xff]
    %v30 = vld [vmem:[%s0 + $0x58] sm:$0xff]
    %v31 = vld [vmem:[%s0 + $0x60] sm:$0xff]
    %v32 = vld [vmem:[%s0 + $0x68] sm:$0xff]
    %v33 = vld [vmem:[%s0 + $0x70] sm:$0xff]
    %v34 = vld [vmem:[%s0 + $0x78] sm:$0xff]
    %v35 = vld [vmem:[%s0 + $0x80] sm:$0xff]
    %v36 = vld [vmem:[%s0 + $0x88] sm:$0xff]
    %v37 = vld [vmem:[%s0 + $0x90] sm:$0xff]
    %v38 = vld [vmem:[%s0 + $0x98] sm:$0xff]
    %v39 = vld [vmem:[%s0 + $0xa0] sm:$0xff]
    %v40 = vld [vmem:[%s0 + $0xa8] sm:$0xff]
    %v41 = vld [vmem:[%s0 + $0xb0] sm:$0xff]
    %v42 = vld [vmem:[%s0 + $0xb8] sm:$0xff]
    %v43 = vld [vmem:[%s0 + $0xc0] sm:$0xff]
    %v44 = vld [vmem:[%s0 + $0xc8] sm:$0xff]
    %v45 = vld [vmem:[%s0 + $0xd0] sm:$0xff]
    %v46 = vld [vmem:[%s0 + $0xd8] sm:$0xff]
    %v47 = vld [vmem:[%s0 + $0xe0] sm:$0xff]
    %v48 = vld [vmem:[%s0 + $0xe8] sm:$0xff]
    %v49 = vld [vmem:[%s0 + $0xf0] sm:$0xff]
    %v50 = vld [vmem:[%s0 + $0xf8] sm:$0xff]
    %v51 = vld [vmem:[%s1] sm:$0xf]
    %v52 = vld [vmem:[%s1 + $0x4] sm:$0xf]
    %v53 = vld [vmem:[%s1 + $0x8] sm:$0xf]
    %v54 = vld [vmem:[%s1 + $0xc] sm:$0xf]
    %v55 = vld [vmem:[%s1 + $0x10] sm:$0xf]
    %v56 = vld [vmem:[%s1 + $0x14] sm:$0xf]
    %v57 = vld [vmem:[%s1 + $0x18] sm:$0xf]
    %v58 = vld [vmem:[%s1 + $0x1c] sm:$0xf]
    %v59 = vld [vmem:[%s1 + $0x20] sm:$0xf]
    %v60 = vld [vmem:[%s1 + $0x24] sm:$0xf]
    %v61 = vld [vmem:[%s1 + $0x28] sm:$0xf]
    %v62 = vld [vmem:[%s1 + $0x2c] sm:$0xf]
    %v63 = vld [vmem:[%s1 + $0x30] sm:$0xf]
    %v64 = vld [vmem:[%s1 + $0x34] sm:$0xf]
    %v65 = vld [vmem:[%s1 + $0x38] sm:$0xf]
    %v66 = vld [vmem:[%s1 + $0x3c] sm:$0xf]
    %v67 = vld [vmem:[%s1 + $0x40] sm:$0xf]
    %v68 = vld [vmem:[%s1 + $0x44] sm:$0xf]
    %v69 = vld [vmem:[%s1 + $0x48] sm:$0xf]
    %v70 = vld [vmem:[%s1 + $0x4c] sm:$0xf]
    %v71 = vld [vmem:[%s1 + $0x50] sm:$0xf]
    %v72 = vld [vmem:[%s1 + $0x54] sm:$0xf]
    %v73 = vld [vmem:[%s1 + $0x58] sm:$0xf]
    %v74 = vld [vmem:[%s1 + $0x5c] sm:$0xf]
    %v75 = vld [vmem:[%s1 + $0x60] sm:$0xf]
    %v76 = vld [vmem:[%s1 + $0x64] sm:$0xf]
    %v77 = vld [vmem:[%s1 + $0x68] sm:$0xf]
    %v78 = vld [vmem:[%s1 + $0x6c] sm:$0xf]
    %v79 = vld [vmem:[%s1 + $0x70] sm:$0xf]
    %v80 = vld [vmem:[%s1 + $0x74] sm:$0xf]
    %v81 = vld [vmem:[%s1 + $0x78] sm:$0xf]
    %v82 = vld [vmem:[%s1 + $0x7c] sm:$0xf]
    %v115 = vunpack.c.l.b16 %v19
    %v116 = vunpack.c.h.b16 %v19
    %v117 = vunpack.c.l.b16 %v20
    %v118 = vunpack.c.h.b16 %v20
    %v119 = vunpack.c.l.b16 %v21
    %v120 = vunpack.c.h.b16 %v21
    %v121 = vunpack.c.l.b16 %v22
    %v122 = vunpack.c.h.b16 %v22
    %v123 = vunpack.c.l.b16 %v23
    %v124 = vunpack.c.h.b16 %v23
    %v125 = vunpack.c.l.b16 %v24
    %v126 = vunpack.c.h.b16 %v24
    %v127 = vunpack.c.l.b16 %v25
    %v128 = vunpack.c.h.b16 %v25
    %v129 = vunpack.c.l.b16 %v26
    %v130 = vunpack.c.h.b16 %v26
    %v131 = vunpack.c.l.b16 %v27
    %v132 = vunpack.c.h.b16 %v27
    %v133 = vunpack.c.l.b16 %v28
    %v134 = vunpack.c.h.b16 %v28
    %v135 = vunpack.c.l.b16 %v29
    %v136 = vunpack.c.h.b16 %v29
    %v137 = vunpack.c.l.b16 %v30
    %v138 = vunpack.c.h.b16 %v30
    %v139 = vunpack.c.l.b16 %v31
    %v140 = vunpack.c.h.b16 %v31
    %v141 = vunpack.c.l.b16 %v32
    %v142 = vunpack.c.h.b16 %v32
    %v143 = vunpack.c.l.b16 %v33
    %v144 = vunpack.c.h.b16 %v33
    %v145 = vunpack.c.l.b16 %v34
    %v146 = vunpack.c.h.b16 %v34
    %v147 = vunpack.c.l.b16 %v35
    %v148 = vunpack.c.h.b16 %v35
    %v149 = vunpack.c.l.b16 %v36
    %v150 = vunpack.c.h.b16 %v36
    %v151 = vunpack.c.l.b16 %v37
    %v152 = vunpack.c.h.b16 %v37
    %v153 = vunpack.c.l.b16 %v38
    %v154 = vunpack.c.h.b16 %v38
    %v155 = vunpack.c.l.b16 %v39
    %v156 = vunpack.c.h.b16 %v39
    %v157 = vunpack.c.l.b16 %v40
    %v158 = vunpack.c.h.b16 %v40
    %v159 = vunpack.c.l.b16 %v41
    %v160 = vunpack.c.h.b16 %v41
    %v161 = vunpack.c.l.b16 %v42
    %v162 = vunpack.c.h.b16 %v42
    %v163 = vunpack.c.l.b16 %v43
    %v164 = vunpack.c.h.b16 %v43
    %v165 = vunpack.c.l.b16 %v44
    %v166 = vunpack.c.h.b16 %v44
    %v167 = vunpack.c.l.b16 %v45
    %v168 = vunpack.c.h.b16 %v45
    %v169 = vunpack.c.l.b16 %v46
    %v170 = vunpack.c.h.b16 %v46
    %v171 = vunpack.c.l.b16 %v47
    %v172 = vunpack.c.h.b16 %v47
    %v173 = vunpack.c.l.b16 %v48
    %v174 = vunpack.c.h.b16 %v48
    %v175 = vunpack.c.l.b16 %v49
    %v176 = vunpack.c.h.b16 %v49
    %v177 = vunpack.c.l.b16 %v50
    %v178 = vunpack.c.h.b16 %v50
    %v179 = vpack.c.b16 %v117, %v115
    %v180 = vpack.c.b16 %v118, %v116
    %v181 = vpack.c.b16 %v121, %v119
    %v182 = vpack.c.b16 %v122, %v120
    %v183 = vpack.c.b16 %v125, %v123
    %v184 = vpack.c.b16 %v126, %v124
    %v185 = vpack.c.b16 %v129, %v127
    %v186 = vpack.c.b16 %v130, %v128
    %v187 = vpack.c.b16 %v133, %v131
    %v188 = vpack.c.b16 %v134, %v132
    %v189 = vpack.c.b16 %v137, %v135
    %v190 = vpack.c.b16 %v138, %v136
    %v191 = vpack.c.b16 %v141, %v139
    %v192 = vpack.c.b16 %v142, %v140
    %v193 = vpack.c.b16 %v145, %v143
    %v194 = vpack.c.b16 %v146, %v144
    %v195 = vpack.c.b16 %v149, %v147
    %v196 = vpack.c.b16 %v150, %v148
    %v197 = vpack.c.b16 %v153, %v151
    %v198 = vpack.c.b16 %v154, %v152
    %v199 = vpack.c.b16 %v157, %v155
    %v200 = vpack.c.b16 %v158, %v156
    %v201 = vpack.c.b16 %v161, %v159
    %v202 = vpack.c.b16 %v162, %v160
    %v203 = vpack.c.b16 %v165, %v163
    %v204 = vpack.c.b16 %v166, %v164
    %v205 = vpack.c.b16 %v169, %v167
    %v206 = vpack.c.b16 %v170, %v168
    %v207 = vpack.c.b16 %v173, %v171
    %v208 = vpack.c.b16 %v174, %v172
    %v209 = vpack.c.b16 %v177, %v175
    %v210 = vpack.c.b16 %v178, %v176
    %v275 = vunpack.c.l.b16 %v51
    %v276 = vunpack.c.l.b16 %v52
    %v277 = vunpack.c.l.b16 %v53
    %v278 = vunpack.c.l.b16 %v54
    %v279 = vunpack.c.l.b16 %v55
    %v280 = vunpack.c.l.b16 %v56
    %v281 = vunpack.c.l.b16 %v57
    %v282 = vunpack.c.l.b16 %v58
    %v283 = vunpack.c.l.b16 %v59
    %v284 = vunpack.c.l.b16 %v60
    %v285 = vunpack.c.l.b16 %v61
    %v286 = vunpack.c.l.b16 %v62
    %v287 = vunpack.c.l.b16 %v63
    %v288 = vunpack.c.l.b16 %v64
    %v289 = vunpack.c.l.b16 %v65
    %v290 = vunpack.c.l.b16 %v66
    %v291 = vunpack.c.l.b16 %v67
    %v292 = vunpack.c.l.b16 %v68
    %v293 = vunpack.c.l.b16 %v69
    %v294 = vunpack.c.l.b16 %v70
    %v295 = vunpack.c.l.b16 %v71
    %v296 = vunpack.c.l.b16 %v72
    %v297 = vunpack.c.l.b16 %v73
    %v298 = vunpack.c.l.b16 %v74
    %v299 = vunpack.c.l.b16 %v75
    %v300 = vunpack.c.l.b16 %v76
    %v301 = vunpack.c.l.b16 %v77
    %v302 = vunpack.c.l.b16 %v78
    %v303 = vunpack.c.l.b16 %v79
    %v304 = vunpack.c.l.b16 %v80
    %v305 = vunpack.c.l.b16 %v81
    %v306 = vunpack.c.l.b16 %v82
    %v307 = vpack.c.b16 %v276, %v275
    %v308 = vpack.c.b16 %v278, %v277
    %v309 = vpack.c.b16 %v280, %v279
    %v310 = vpack.c.b16 %v282, %v281
    %v311 = vpack.c.b16 %v284, %v283
    %v312 = vpack.c.b16 %v286, %v285
    %v313 = vpack.c.b16 %v288, %v287
    %v314 = vpack.c.b16 %v290, %v289
    %v315 = vpack.c.b16 %v292, %v291
    %v316 = vpack.c.b16 %v294, %v293
    %v317 = vpack.c.b16 %v296, %v295
    %v318 = vpack.c.b16 %v298, %v297
    %v319 = vpack.c.b16 %v300, %v299
    %v320 = vpack.c.b16 %v302, %v301
    %v321 = vpack.c.b16 %v304, %v303
    %v322 = vpack.c.b16 %v306, %v305
    %339 = vmatprep.subr.bf16.mxu0 0
    %340 = vmatpush1.bf16.msra.mxu0 %v314
    %341 = vmatprep.subr.bf16.mxu0 0
    %342 = vmatpush1.bf16.msra.mxu0 %v313
    %343 = vmatprep.subr.bf16.mxu0 0
    %344 = vmatpush1.bf16.msra.mxu0 %v312
    %345 = vmatprep.subr.bf16.mxu0 0
    %346 = vmatpush1.bf16.msra.mxu0 %v311
    %347 = vmatprep.subr.bf16.mxu0 0
    %348 = vmatpush1.bf16.msra.mxu0 %v310
    %349 = vmatprep.subr.bf16.mxu0 0
    %350 = vmatpush1.bf16.msra.mxu0 %v309
    %351 = vmatprep.subr.bf16.mxu0 0
    %352 = vmatpush1.bf16.msra.mxu0 %v308
    %353 = vmatprep.subr.bf16.mxu0 0
    %354 = vmatpush1.bf16.msra.mxu0 %v307
    %355 = vmatprep.subr.bf16.mxu0 0
    %356 = vmatpush2.bf16.msra.mxu0 %v322
    %357 = vmatprep.subr.bf16.mxu0 0
    %358 = vmatpush2.bf16.msra.mxu0 %v321
    %359 = vmatprep.subr.bf16.mxu0 0
    %360 = vmatpush2.bf16.msra.mxu0 %v320
    %361 = vmatprep.subr.bf16.mxu0 0
    %362 = vmatpush2.bf16.msra.mxu0 %v319
    %363 = vmatprep.subr.bf16.mxu0 0
    %364 = vmatpush2.bf16.msra.mxu0 %v318
    %365 = vmatprep.subr.bf16.mxu0 0
    %366 = vmatpush2.bf16.msra.mxu0 %v317
    %367 = vmatprep.subr.bf16.mxu0 0
    %368 = vmatpush2.bf16.msra.mxu0 %v316
    %369 = vmatprep.subr.bf16.mxu0 0
    %370 = vmatpush2.bf16.msra.mxu0 %v315
    %371 = vmatprep.mubr.bf16.mxu0 %v180
    %372 = vmatmul.mubr.bf16.gmra.mxu0 %v179
    %v373 = vpop.f32.mrf.mxu0
    %v374 = vadd.f32 0.0, %v373
    %v375 = vpop.f32.mrf.mxu0
    %v376 = vpop.f32.mrf.mxu0
    %v377 = vadd.f32 0.0, %v376
    %v378 = vpop.f32.mrf.mxu0
    %379 = vmatprep.mubr.bf16.mxu0 %v182
    %380 = vmatmul.mubr.bf16.gmra.mxu0 %v181
    %v381 = vpop.f32.mrf.mxu0
    %v382 = vadd.f32 0.0, %v381
    %v383 = vpop.f32.mrf.mxu0
    %v384 = vpop.f32.mrf.mxu0
    %v385 = vadd.f32 0.0, %v384
    %v386 = vpop.f32.mrf.mxu0
    %387 = vmatprep.mubr.bf16.mxu0 %v184
    %388 = vmatmul.mubr.bf16.gmra.mxu0 %v183
    %v389 = vpop.f32.mrf.mxu0
    %v390 = vadd.f32 0.0, %v389
    %v391 = vpop.f32.mrf.mxu0
    %v392 = vpop.f32.mrf.mxu0
    %v393 = vadd.f32 0.0, %v392
    %v394 = vpop.f32.mrf.mxu0
    %395 = vmatprep.mubr.bf16.mxu0 %v186
    %396 = vmatmul.mubr.bf16.gmra.mxu0 %v185
    %v397 = vpop.f32.mrf.mxu0
    %v398 = vadd.f32 0.0, %v397
    %v399 = vpop.f32.mrf.mxu0
    %v400 = vpop.f32.mrf.mxu0
    %v401 = vadd.f32 0.0, %v400
    %v402 = vpop.f32.mrf.mxu0
    %403 = vmatprep.mubr.bf16.mxu0 %v188
    %404 = vmatmul.mubr.bf16.gmra.mxu0 %v187
    %v405 = vpop.f32.mrf.mxu0
    %v406 = vadd.f32 0.0, %v405
    %v407 = vpop.f32.mrf.mxu0
    %v408 = vpop.f32.mrf.mxu0
    %v409 = vadd.f32 0.0, %v408
    %v410 = vpop.f32.mrf.mxu0
    %411 = vmatprep.mubr.bf16.mxu0 %v190
    %412 = vmatmul.mubr.bf16.gmra.mxu0 %v189
    %v413 = vpop.f32.mrf.mxu0
    %v414 = vadd.f32 0.0, %v413
    %v415 = vpop.f32.mrf.mxu0
    %v416 = vpop.f32.mrf.mxu0
    %v417 = vadd.f32 0.0, %v416
    %v418 = vpop.f32.mrf.mxu0
    %419 = vmatprep.mubr.bf16.mxu0 %v192
    %420 = vmatmul.mubr.bf16.gmra.mxu0 %v191
    %v421 = vpop.f32.mrf.mxu0
    %v422 = vadd.f32 0.0, %v421
    %v423 = vpop.f32.mrf.mxu0
    %v424 = vpop.f32.mrf.mxu0
    %v425 = vadd.f32 0.0, %v424
    %v426 = vpop.f32.mrf.mxu0
    %427 = vmatprep.mubr.bf16.mxu0 %v194
    %428 = vmatmul.mubr.bf16.gmra.mxu0 %v193
    %v429 = vpop.f32.mrf.mxu0
    %v430 = vadd.f32 0.0, %v429
    %v431 = vpop.f32.mrf.mxu0
    %v432 = vpop.f32.mrf.mxu0
    %v433 = vadd.f32 0.0, %v432
    %v434 = vpop.f32.mrf.mxu0
    %435 = vmatprep.mubr.bf16.mxu0 %v196
    %436 = vmatmul.mubr.bf16.gmra.mxu0 %v195
    %v437 = vpop.f32.mrf.mxu0
    %v438 = vadd.f32 0.0, %v437
    %v439 = vpop.f32.mrf.mxu0
    %v440 = vpop.f32.mrf.mxu0
    %v441 = vadd.f32 0.0, %v440
    %v442 = vpop.f32.mrf.mxu0
    %443 = vmatprep.mubr.bf16.mxu0 %v198
    %444 = vmatmul.mubr.bf16.gmra.mxu0 %v197
    %v445 = vpop.f32.mrf.mxu0
    %v446 = vadd.f32 0.0, %v445
    %v447 = vpop.f32.mrf.mxu0
    %v448 = vpop.f32.mrf.mxu0
    %v449 = vadd.f32 0.0, %v448
    %v450 = vpop.f32.mrf.mxu0
    %451 = vmatprep.mubr.bf16.mxu0 %v200
    %452 = vmatmul.mubr.bf16.gmra.mxu0 %v199
    %v453 = vpop.f32.mrf.mxu0
    %v454 = vadd.f32 0.0, %v453
    %v455 = vpop.f32.mrf.mxu0
    %v456 = vpop.f32.mrf.mxu0
    %v457 = vadd.f32 0.0, %v456
    %v458 = vpop.f32.mrf.mxu0
    %459 = vmatprep.mubr.bf16.mxu0 %v202
    %460 = vmatmul.mubr.bf16.gmra.mxu0 %v201
    %v461 = vpop.f32.mrf.mxu0
    %v462 = vadd.f32 0.0, %v461
    %v463 = vpop.f32.mrf.mxu0
    %v464 = vpop.f32.mrf.mxu0
    %v465 = vadd.f32 0.0, %v464
    %v466 = vpop.f32.mrf.mxu0
    %467 = vmatprep.mubr.bf16.mxu0 %v204
    %468 = vmatmul.mubr.bf16.gmra.mxu0 %v203
    %v469 = vpop.f32.mrf.mxu0
    %v470 = vadd.f32 0.0, %v469
    %v471 = vpop.f32.mrf.mxu0
    %v472 = vpop.f32.mrf.mxu0
    %v473 = vadd.f32 0.0, %v472
    %v474 = vpop.f32.mrf.mxu0
    %475 = vmatprep.mubr.bf16.mxu0 %v206
    %476 = vmatmul.mubr.bf16.gmra.mxu0 %v205
    %v477 = vpop.f32.mrf.mxu0
    %v478 = vadd.f32 0.0, %v477
    %v479 = vpop.f32.mrf.mxu0
    %v480 = vpop.f32.mrf.mxu0
    %v481 = vadd.f32 0.0, %v480
    %v482 = vpop.f32.mrf.mxu0
    %483 = vmatprep.mubr.bf16.mxu0 %v208
    %484 = vmatmul.mubr.bf16.gmra.mxu0 %v207
    %v485 = vpop.f32.mrf.mxu0
    %v486 = vadd.f32 0.0, %v485
    %v487 = vpop.f32.mrf.mxu0
    %v488 = vpop.f32.mrf.mxu0
    %v489 = vadd.f32 0.0, %v488
    %v490 = vpop.f32.mrf.mxu0
    %491 = vmatprep.mubr.bf16.mxu0 %v210
    %492 = vmatmul.mubr.bf16.gmra.mxu0 %v209
    %v493 = vpop.f32.mrf.mxu0
    %v494 = vadd.f32 0.0, %v493
    %v495 = vpop.f32.mrf.mxu0
    %v496 = vpop.f32.mrf.mxu0
    %v497 = vadd.f32 0.0, %v496
    %v498 = vpop.f32.mrf.mxu0
    %499 = vdwg.mxu0
    %v500 = vld [vmem:[%s2] sm:$0x1]
    %v502 = vlaneseq
    %v503 = vshrl.u32 %v502, 7
    %v504 = vsub.s32 0, %v503
    %v505 = vrot.slane %v500, %v504
    %v507 = vmul.f32 %v374, %v505
    %v508 = vmul.f32 %v377, %v505
    %v509 = vmul.f32 %v382, %v505
    %v510 = vmul.f32 %v385, %v505
    %v511 = vmul.f32 %v390, %v505
    %v512 = vmul.f32 %v393, %v505
    %v513 = vmul.f32 %v398, %v505
    %v514 = vmul.f32 %v401, %v505
    %v515 = vmul.f32 %v406, %v505
    %v516 = vmul.f32 %v409, %v505
    %v517 = vmul.f32 %v414, %v505
    %v518 = vmul.f32 %v417, %v505
    %v519 = vmul.f32 %v422, %v505
    %v520 = vmul.f32 %v425, %v505
    %v521 = vmul.f32 %v430, %v505
    %v522 = vmul.f32 %v433, %v505
    %v523 = vmul.f32 %v438, %v505
    %v524 = vmul.f32 %v441, %v505
    %v525 = vmul.f32 %v446, %v505
    %v526 = vmul.f32 %v449, %v505
    %v527 = vmul.f32 %v454, %v505
    %v528 = vmul.f32 %v457, %v505
    %v529 = vmul.f32 %v462, %v505
    %v530 = vmul.f32 %v465, %v505
    %v531 = vmul.f32 %v470, %v505
    %v532 = vmul.f32 %v473, %v505
    %v533 = vmul.f32 %v478, %v505
    %v534 = vmul.f32 %v481, %v505
    %v535 = vmul.f32 %v486, %v505
    %v536 = vmul.f32 %v489, %v505
    %v537 = vmul.f32 %v494, %v505
    %v538 = vmul.f32 %v497, %v505
    %v539 = vld [vmem:[%s3] sm:$0x1]
    %v541 = vlaneseq
    %v542 = vshrl.u32 %v541, 7
    %v543 = vsub.s32 0, %v542
    %v544 = vrot.slane %v539, %v543
    %v546 = vadd.f32 %v507, %v544
    %v547 = vadd.f32 %v508, %v544
    %v548 = vadd.f32 %v509, %v544
    %v549 = vadd.f32 %v510, %v544
    %v550 = vadd.f32 %v511, %v544
    %v551 = vadd.f32 %v512, %v544
    %v552 = vadd.f32 %v513, %v544
    %v553 = vadd.f32 %v514, %v544
    %v554 = vadd.f32 %v515, %v544
    %v555 = vadd.f32 %v516, %v544
    %v556 = vadd.f32 %v517, %v544
    %v557 = vadd.f32 %v518, %v544
    %v558 = vadd.f32 %v519, %v544
    %v559 = vadd.f32 %v520, %v544
    %v560 = vadd.f32 %v521, %v544
    %v561 = vadd.f32 %v522, %v544
    %v562 = vadd.f32 %v523, %v544
    %v563 = vadd.f32 %v524, %v544
    %v564 = vadd.f32 %v525, %v544
    %v565 = vadd.f32 %v526, %v544
    %v566 = vadd.f32 %v527, %v544
    %v567 = vadd.f32 %v528, %v544
    %v568 = vadd.f32 %v529, %v544
    %v569 = vadd.f32 %v530, %v544
    %v570 = vadd.f32 %v531, %v544
    %v571 = vadd.f32 %v532, %v544
    %v572 = vadd.f32 %v533, %v544
    %v573 = vadd.f32 %v534, %v544
    %v574 = vadd.f32 %v535, %v544
    %v575 = vadd.f32 %v536, %v544
    %v576 = vadd.f32 %v537, %v544
    %v577 = vadd.f32 %v538, %v544
    %v578 = vmax.f32 %v546, 0.0
    %v579 = vmax.f32 %v547, 0.0
    %v580 = vmax.f32 %v548, 0.0
    %v581 = vmax.f32 %v549, 0.0
    %v582 = vmax.f32 %v550, 0.0
    %v583 = vmax.f32 %v551, 0.0
    %v584 = vmax.f32 %v552, 0.0
    %v585 = vmax.f32 %v553, 0.0
    %v586 = vmax.f32 %v554, 0.0
    %v587 = vmax.f32 %v555, 0.0
    %v588 = vmax.f32 %v556, 0.0
    %v589 = vmax.f32 %v557, 0.0
    %v590 = vmax.f32 %v558, 0.0
    %v591 = vmax.f32 %v559, 0.0
    %v592 = vmax.f32 %v560, 0.0
    %v593 = vmax.f32 %v561, 0.0
    %v594 = vmax.f32 %v562, 0.0
    %v595 = vmax.f32 %v563, 0.0
    %v596 = vmax.f32 %v564, 0.0
    %v597 = vmax.f32 %v565, 0.0
    %v598 = vmax.f32 %v566, 0.0
    %v599 = vmax.f32 %v567, 0.0
    %v600 = vmax.f32 %v568, 0.0
    %v601 = vmax.f32 %v569, 0.0
    %v602 = vmax.f32 %v570, 0.0
    %v603 = vmax.f32 %v571, 0.0
    %v604 = vmax.f32 %v572, 0.0
    %v605 = vmax.f32 %v573, 0.0
    %v606 = vmax.f32 %v574, 0.0
    %v607 = vmax.f32 %v575, 0.0
    %v608 = vmax.f32 %v576, 0.0
    %v609 = vmax.f32 %v577, 0.0
    %v610 = vpack.c.bf16 %v579, %v578
    %v611 = vpack.c.bf16 %v581, %v580
    %v612 = vpack.c.bf16 %v583, %v582
    %v613 = vpack.c.bf16 %v585, %v584
    %v614 = vpack.c.bf16 %v587, %v586
    %v615 = vpack.c.bf16 %v589, %v588
    %v616 = vpack.c.bf16 %v591, %v590
    %v617 = vpack.c.bf16 %v593, %v592
    %v618 = vpack.c.bf16 %v595, %v594
    %v619 = vpack.c.bf16 %v597, %v596
    %v620 = vpack.c.bf16 %v599, %v598
    %v621 = vpack.c.bf16 %v601, %v600
    %v622 = vpack.c.bf16 %v603, %v602
    %v623 = vpack.c.bf16 %v605, %v604
    %v624 = vpack.c.bf16 %v607, %v606
    %v625 = vpack.c.bf16 %v609, %v608
    %v642 = vunpack.c.l.b16 %v610
    %v643 = vunpack.c.h.b16 %v610
    %v644 = vunpack.c.l.b16 %v611
    %v645 = vunpack.c.h.b16 %v611
    %v646 = vunpack.c.l.b16 %v612
    %v647 = vunpack.c.h.b16 %v612
    %v648 = vunpack.c.l.b16 %v613
    %v649 = vunpack.c.h.b16 %v613
    %v650 = vunpack.c.l.b16 %v614
    %v651 = vunpack.c.h.b16 %v614
    %v652 = vunpack.c.l.b16 %v615
    %v653 = vunpack.c.h.b16 %v615
    %v654 = vunpack.c.l.b16 %v616
    %v655 = vunpack.c.h.b16 %v616
    %v656 = vunpack.c.l.b16 %v617
    %v657 = vunpack.c.h.b16 %v617
    %v658 = vunpack.c.l.b16 %v618
    %v659 = vunpack.c.h.b16 %v618
    %v660 = vunpack.c.l.b16 %v619
    %v661 = vunpack.c.h.b16 %v619
    %v662 = vunpack.c.l.b16 %v620
    %v663 = vunpack.c.h.b16 %v620
    %v664 = vunpack.c.l.b16 %v621
    %v665 = vunpack.c.h.b16 %v621
    %v666 = vunpack.c.l.b16 %v622
    %v667 = vunpack.c.h.b16 %v622
    %v668 = vunpack.c.l.b16 %v623
    %v669 = vunpack.c.h.b16 %v623
    %v670 = vunpack.c.l.b16 %v624
    %v671 = vunpack.c.h.b16 %v624
    %v672 = vunpack.c.l.b16 %v625
    %v673 = vunpack.c.h.b16 %v625
    %v674 = vpack.c.b16 %v642, %v642
    %v675 = vpack.c.b16 %v643, %v643
    %v676 = vpack.c.b16 %v644, %v644
    %v677 = vpack.c.b16 %v645, %v645
    %v678 = vpack.c.b16 %v646, %v646
    %v679 = vpack.c.b16 %v647, %v647
    %v680 = vpack.c.b16 %v648, %v648
    %v681 = vpack.c.b16 %v649, %v649
    %v682 = vpack.c.b16 %v650, %v650
    %v683 = vpack.c.b16 %v651, %v651
    %v684 = vpack.c.b16 %v652, %v652
    %v685 = vpack.c.b16 %v653, %v653
    %v686 = vpack.c.b16 %v654, %v654
    %v687 = vpack.c.b16 %v655, %v655
    %v688 = vpack.c.b16 %v656, %v656
    %v689 = vpack.c.b16 %v657, %v657
    %v690 = vpack.c.b16 %v658, %v658
    %v691 = vpack.c.b16 %v659, %v659
    %v692 = vpack.c.b16 %v660, %v660
    %v693 = vpack.c.b16 %v661, %v661
    %v694 = vpack.c.b16 %v662, %v662
    %v695 = vpack.c.b16 %v663, %v663
    %v696 = vpack.c.b16 %v664, %v664
    %v697 = vpack.c.b16 %v665, %v665
    %v698 = vpack.c.b16 %v666, %v666
    %v699 = vpack.c.b16 %v667, %v667
    %v700 = vpack.c.b16 %v668, %v668
    %v701 = vpack.c.b16 %v669, %v669
    %v702 = vpack.c.b16 %v670, %v670
    %v703 = vpack.c.b16 %v671, %v671
    %v704 = vpack.c.b16 %v672, %v672
    %v705 = vpack.c.b16 %v673, %v673
    %738 = vst [vmem:[#allocation2] sm:$0xf] %v674
    %739 = vst [vmem:[#allocation2 + $0x4] sm:$0xf] %v675
    %740 = vst [vmem:[#allocation2 + $0x8] sm:$0xf] %v676
    %741 = vst [vmem:[#allocation2 + $0xc] sm:$0xf] %v677
    %742 = vst [vmem:[#allocation2 + $0x10] sm:$0xf] %v678
    %743 = vst [vmem:[#allocation2 + $0x14] sm:$0xf] %v679
    %744 = vst [vmem:[#allocation2 + $0x18] sm:$0xf] %v680
    %745 = vst [vmem:[#allocation2 + $0x1c] sm:$0xf] %v681
    %746 = vst [vmem:[#allocation2 + $0x20] sm:$0xf] %v682
    %747 = vst [vmem:[#allocation2 + $0x24] sm:$0xf] %v683
    %748 = vst [vmem:[#allocation2 + $0x28] sm:$0xf] %v684
    %749 = vst [vmem:[#allocation2 + $0x2c] sm:$0xf] %v685
    %750 = vst [vmem:[#allocation2 + $0x30] sm:$0xf] %v686
    %751 = vst [vmem:[#allocation2 + $0x34] sm:$0xf] %v687
    %752 = vst [vmem:[#allocation2 + $0x38] sm:$0xf] %v688
    %753 = vst [vmem:[#allocation2 + $0x3c] sm:$0xf] %v689
    %754 = vst [vmem:[#allocation2 + $0x40] sm:$0xf] %v690
    %755 = vst [vmem:[#allocation2 + $0x44] sm:$0xf] %v691
    %756 = vst [vmem:[#allocation2 + $0x48] sm:$0xf] %v692
    %757 = vst [vmem:[#allocation2 + $0x4c] sm:$0xf] %v693
    %758 = vst [vmem:[#allocation2 + $0x50] sm:$0xf] %v694
    %759 = vst [vmem:[#allocation2 + $0x54] sm:$0xf] %v695
    %760 = vst [vmem:[#allocation2 + $0x58] sm:$0xf] %v696
    %761 = vst [vmem:[#allocation2 + $0x5c] sm:$0xf] %v697
    %762 = vst [vmem:[#allocation2 + $0x60] sm:$0xf] %v698
    %763 = vst [vmem:[#allocation2 + $0x64] sm:$0xf] %v699
    %764 = vst [vmem:[#allocation2 + $0x68] sm:$0xf] %v700
    %765 = vst [vmem:[#allocation2 + $0x6c] sm:$0xf] %v701
    %766 = vst [vmem:[#allocation2 + $0x70] sm:$0xf] %v702
    %767 = vst [vmem:[#allocation2 + $0x74] sm:$0xf] %v703
    %768 = vst [vmem:[#allocation2 + $0x78] sm:$0xf] %v704
    %769 = vst [vmem:[#allocation2 + $0x7c] sm:$0xf] %v705
    // Predicated region
    $region18: #{conv2d_bn_act.1} parent=1 // pred_check
      _
    $region19: #{conv2d_bn_act.1} parent=1 // pred_check_branch
      %771 = sbr.rel (0) target = $region21
    $region20: #{conv2d_bn_act.1} parent=1 // pred_region
      %s773 = ssub.s32 2048, 2048
      %774 = vsyncadd [#allocation3], %s773
      %s775 = sshll.u32 [#allocation2], 4
      %s776 = int_to_ptr.vmem [resolvable:$true] %s775
      %781 = dma.vmem_to_hbm [thread:$0]  %s776, 2048, %s4, [#allocation3], 64, 64, 4
    $region21: #{conv2d_bn_act.1} parent=1 // pred_fallthru
      _
    // Predicated region
    $region22: #{conv2d_bn_act.1} parent=1 // pred_check
      _
    $region23: #{conv2d_bn_act.1} parent=1 // pred_check_branch
      %783 = sbr.rel (0) target = $region25
    $region24: #{conv2d_bn_act.1} parent=1 // pred_region
      %784 = dma.done [#allocation3], 2048
    $region25: #{conv2d_bn_act.1} parent=1 // pred_fallthru
      _
    %785 = vsyncpa [#allocation3], 1

</llo_original>
